<compile_context>
chip_gen: v5e
topology: v5e:2x2
jax: 0.10.0
libtpu: 0.0.40
codegen_flags: <defaults>
</compile_context>

<pallas_src>
import math
import jax
import jax.numpy as jnp
from jax.experimental import pallas as pl
from jax.experimental.pallas import tpu as pltpu

# small, forward-consistent shapes
BATCH = 2
IN_CH = 3
PATCH = 4
IMG = 16
EMB = 128
NUM_PATCHES = (IMG // PATCH) ** 2          # 16
SEQ = NUM_PATCHES + 2                      # 18 (cls + dist + patches)
PATCH_DIM = PATCH * PATCH * IN_CH          # 48


def patch_embed_kernel(patches_ref, w_ref, head_ref, tail_ref, out_ref):
    # patches_ref: (B*N, P)   w_ref: (P, E)
    # head_ref: (2, E) = concat(cls, dist) + pos[:2]
    # tail_ref: (N, E) = pos[2:] + bias
    # out_ref:  (B, S, E)
    B, S, E = out_ref.shape
    N = S - 2

    # One fused MXU matmul over all batches' patches: (B*N, P) @ (P, E).
    proj = jnp.dot(patches_ref[...], w_ref[...],
                   preferred_element_type=jnp.float32)          # (B*N, E)
    # Batch-invariant (pos + bias) added once to all batches.
    proj = proj.reshape(B, N, E) + tail_ref[...]                # (B, N, E)

    head = head_ref[...].astype(out_ref.dtype)                  # (2, E)

    for bi in range(B):  # static, tiny batch -> fully unrolled
        out_ref[bi, 0:2, :] = head                              # cls/dist rows
        out_ref[bi, 2:S, :] = proj[bi].astype(out_ref.dtype)    # patch rows


def patch_embedding(x, folded_params):
    """x: (B, C, H, W) float32.  folded_params: (w, head, tail)."""
    w, head, tail = folded_params
    B, C, H, W = x.shape
    hp, wp = H // PATCH, W // PATCH
    N = hp * wp
    P = PATCH * PATCH * C
    E = w.shape[1]
    S = N + 2

    # einops Rearrange done wrapper-side (pure layout plumbing, no compute):
    # 'b c (h s1) (w s2) -> b (h w) (s1 s2 c)', then flatten batch into rows
    # so the kernel sees one lane-dense (B*N, P) activation slab. With
    # allow_input_fusion on this operand (and the call under jit), XLA fuses
    # this transpose/reshape into the pallas_call input DMA.
    patches = x.reshape(B, C, hp, PATCH, wp, PATCH)
    patches = patches.transpose(0, 2, 4, 3, 5, 1).reshape(B * N, P)

    return pl.pallas_call(
        patch_embed_kernel,
        out_shape=jax.ShapeDtypeStruct((B, S, E), x.dtype),
        grid_spec=pltpu.PrefetchScalarGridSpec(
            num_scalar_prefetch=0,
            grid=(1,),
            in_specs=[
                pl.BlockSpec((B * N, P), lambda i: (0, 0)),   # patches
                pl.BlockSpec((P, E), lambda i: (0, 0)),       # W (in, out)
                pl.BlockSpec((2, E), lambda i: (0, 0)),       # head tokens
                pl.BlockSpec((N, E), lambda i: (0, 0)),       # tail (pos+bias)
            ],
            out_specs=pl.BlockSpec((B, S, E), lambda i: (0, 0, 0)),
        ),
        compiler_params=pltpu.CompilerParams(
            dimension_semantics=("arbitrary",),
            allow_input_fusion=[True, False, False, False],
        ),
    )(patches, w, head, tail)


def make_params(key):
    """Deterministic synthetic params. Linear weight stored as (in, out)."""
    kw, kb, kc, kd, kp = jax.random.split(key, 5)
    bound = 1.0 / math.sqrt(PATCH_DIM)
    w = jax.random.uniform(kw, (PATCH_DIM, EMB), jnp.float32, -bound, bound)
    b = jax.random.uniform(kb, (1, EMB), jnp.float32, -bound, bound)
    cls_tok = jax.random.normal(kc, (1, 1, EMB), jnp.float32)
    dist_tok = jax.random.normal(kd, (1, 1, EMB), jnp.float32)
    pos = jax.random.normal(kp, (1, SEQ, EMB), jnp.float32)
    return w, b, cls_tok, dist_tok, pos


def fold_params(params):
    """One-time folding of the 5 small params into (w, head, tail).

    head = [cls; dist] + pos[:2]   (2, E)
    tail = pos[2:] + bias          (N, E)
    Pure parameter arithmetic; kept out of the per-call hot path.
    """
    w, b, cls_tok, dist_tok, pos = params
    head = jnp.concatenate([cls_tok[0], dist_tok[0]], axis=0) + pos[0, :2]
    tail = pos[0, 2:] + b
    return w, head, tail


def patch_embedding_ref(x, params):
    """Pure-JAX reference mirroring the PyTorch forward (unfolded params)."""
    w, b, cls_tok, dist_tok, pos = params
    B, C, H, W = x.shape
    hp, wp = H // PATCH, W // PATCH
    # Rearrange 'b c (h s1) (w s2) -> b (h w) (s1 s2 c)'
    patches = x.reshape(B, C, hp, PATCH, wp, PATCH)
    patches = patches.transpose(0, 2, 4, 3, 5, 1).reshape(
        B, hp * wp, PATCH * PATCH * C)
    proj = patches @ w + b                                   # nn.Linear
    cls_r = jnp.broadcast_to(cls_tok, (B, 1, EMB))           # repeat over batch
    dist_r = jnp.broadcast_to(dist_tok, (B, 1, EMB))
    out = jnp.concatenate([cls_r, dist_r, proj], axis=1)
    return out + pos


if __name__ == "__main__":
    key = jax.random.PRNGKey(0)
    kx, kp = jax.random.split(key)
    x = jax.random.normal(kx, (BATCH, IN_CH, IMG, IMG), jnp.float32)
    params = make_params(kp)
    folded = fold_params(params)          # one-time, out of the hot path

    fwd = jax.jit(patch_embedding)        # jit so patchify fuses into the call
    out = jax.block_until_ready(fwd(x, folded))

    ref = patch_embedding_ref(x, params)
    assert out.shape == (BATCH, SEQ, EMB)
    assert jnp.allclose(out, ref, atol=1e-4, rtol=1e-4), "mismatch vs reference"
    print("KERNEL_OK")
</pallas_src>

<mosaic_0001>
module attributes {stable_mosaic.version = 11 : i64} {
  func.func @patch_embed_kernel(%arg0: i32, %arg1: memref<32x48xf32, #tpu.memory_space<vmem>>, %arg2: memref<48x128xf32, #tpu.memory_space<vmem>>, %arg3: memref<2x128xf32, #tpu.memory_space<vmem>>, %arg4: memref<16x128xf32, #tpu.memory_space<vmem>>, %arg5: memref<2x18x128xf32, #tpu.memory_space<vmem>>) attributes {dimension_semantics = [#tpu.dimension_semantics<arbitrary>], iteration_bounds = array<i64: 1>, scalar_prefetch = 0 : i64, scratch_operands = 0 : i64, tpu.core_type = #tpu.core_type<tc>, window_params = [{pipeline_mode = #tpu.pipeline_mode<synchronous>, transform_indices = @transform_0, window_bounds = array<i64: 32, 48>}, {pipeline_mode = #tpu.pipeline_mode<synchronous>, transform_indices = @transform_1, window_bounds = array<i64: 48, 128>}, {pipeline_mode = #tpu.pipeline_mode<synchronous>, transform_indices = @transform_2, window_bounds = array<i64: 2, 128>}, {pipeline_mode = #tpu.pipeline_mode<synchronous>, transform_indices = @transform_3, window_bounds = array<i64: 16, 128>}, {pipeline_mode = #tpu.pipeline_mode<synchronous>, transform_indices = @transform_4, window_bounds = array<i64: 2, 18, 128>}]} {
    %c0 = arith.constant 0 : index
    %c0_0 = arith.constant 0 : index
    %0 = vector.load %arg1[%c0, %c0_0] : memref<32x48xf32, #tpu.memory_space<vmem>>, vector<32x48xf32>
    %c0_1 = arith.constant 0 : index
    %c0_2 = arith.constant 0 : index
    %1 = vector.load %arg2[%c0_1, %c0_2] : memref<48x128xf32, #tpu.memory_space<vmem>>, vector<48x128xf32>
    %cst = arith.constant dense<0.000000e+00> : vector<32x128xf32>
    %2 = tpu.matmul %0, %1, %cst {dimension_numbers = #tpu.dot_dimension_numbers<[1], [0], [0], [1], [0, 0, 1, 1], [], []>} : vector<32x48xf32>, vector<48x128xf32>, vector<32x128xf32> -> vector<32x128xf32>
    %3 = vector.shape_cast %2 : vector<32x128xf32> to vector<2x16x128xf32>
    %c0_3 = arith.constant 0 : index
    %c0_4 = arith.constant 0 : index
    %4 = vector.load %arg4[%c0_3, %c0_4] : memref<16x128xf32, #tpu.memory_space<vmem>>, vector<16x128xf32>
    %5 = vector.shape_cast %4 : vector<16x128xf32> to vector<1x16x128xf32>
    %6 = vector.broadcast %5 : vector<1x16x128xf32> to vector<2x16x128xf32>
    %7 = arith.addf %3, %6 : vector<2x16x128xf32>
    %c0_5 = arith.constant 0 : index
    %c0_6 = arith.constant 0 : index
    %8 = vector.load %arg3[%c0_5, %c0_6] : memref<2x128xf32, #tpu.memory_space<vmem>>, vector<2x128xf32>
    %c0_7 = arith.constant 0 : index
    %c0_8 = arith.constant 0 : index
    %c0_9 = arith.constant 0 : index
    %9 = vector.load %arg5[%c0_7, %c0_8, %c0_9] : memref<2x18x128xf32, #tpu.memory_space<vmem>>, vector<1x2x128xf32>
    %10 = vector.shape_cast %9 : vector<1x2x128xf32> to vector<2x128xf32>
    %11 = vector.shape_cast %8 : vector<2x128xf32> to vector<1x2x128xf32>
    tpu.vector_store %arg5[%c0_7, %c0_8, %c0_9], %11 {strides = array<i32>} : memref<2x18x128xf32, #tpu.memory_space<vmem>>, vector<1x2x128xf32>,
    %12 = vector.extract_strided_slice %7 {offsets = [0, 0, 0], sizes = [1, 16, 128], strides = [1, 1, 1]} : vector<2x16x128xf32> to vector<1x16x128xf32>
    %13 = vector.shape_cast %12 : vector<1x16x128xf32> to vector<16x128xf32>
    %c0_10 = arith.constant 0 : index
    %c2 = arith.constant 2 : index
    %c0_11 = arith.constant 0 : index
    %14 = vector.load %arg5[%c0_10, %c2, %c0_11] : memref<2x18x128xf32, #tpu.memory_space<vmem>>, vector<1x16x128xf32>
    %15 = vector.shape_cast %14 : vector<1x16x128xf32> to vector<16x128xf32>
    %16 = vector.shape_cast %13 : vector<16x128xf32> to vector<1x16x128xf32>
    tpu.vector_store %arg5[%c0_10, %c2, %c0_11], %16 {strides = array<i32>} : memref<2x18x128xf32, #tpu.memory_space<vmem>>, vector<1x16x128xf32>,
    %c1 = arith.constant 1 : index
    %c0_12 = arith.constant 0 : index
    %c0_13 = arith.constant 0 : index
    %17 = vector.load %arg5[%c1, %c0_12, %c0_13] : memref<2x18x128xf32, #tpu.memory_space<vmem>>, vector<1x2x128xf32>
    %18 = vector.shape_cast %17 : vector<1x2x128xf32> to vector<2x128xf32>
    %19 = vector.shape_cast %8 : vector<2x128xf32> to vector<1x2x128xf32>
    tpu.vector_store %arg5[%c1, %c0_12, %c0_13], %19 {strides = array<i32>} : memref<2x18x128xf32, #tpu.memory_space<vmem>>, vector<1x2x128xf32>,
    %20 = vector.extract_strided_slice %7 {offsets = [1, 0, 0], sizes = [1, 16, 128], strides = [1, 1, 1]} : vector<2x16x128xf32> to vector<1x16x128xf32>
    %21 = vector.shape_cast %20 : vector<1x16x128xf32> to vector<16x128xf32>
    %c1_14 = arith.constant 1 : index
    %c2_15 = arith.constant 2 : index
    %c0_16 = arith.constant 0 : index
    %22 = vector.load %arg5[%c1_14, %c2_15, %c0_16] : memref<2x18x128xf32, #tpu.memory_space<vmem>>, vector<1x16x128xf32>
    %23 = vector.shape_cast %22 : vector<1x16x128xf32> to vector<16x128xf32>
    %24 = vector.shape_cast %21 : vector<16x128xf32> to vector<1x16x128xf32>
    tpu.vector_store %arg5[%c1_14, %c2_15, %c0_16], %24 {strides = array<i32>} : memref<2x18x128xf32, #tpu.memory_space<vmem>>, vector<1x16x128xf32>,
    return
  }
  func.func @transform_0(%arg0: i32) -> (i32, i32) {
    %c0_i32 = arith.constant 0 : i32
    %c0_i32_0 = arith.constant 0 : i32
    %c0_i32_1 = arith.constant 0 : i32
    return %c0_i32, %c0_i32_0 : i32, i32
  }
  func.func @transform_1(%arg0: i32) -> (i32, i32) {
    %c0_i32 = arith.constant 0 : i32
    %c0_i32_0 = arith.constant 0 : i32
    %c0_i32_1 = arith.constant 0 : i32
    return %c0_i32, %c0_i32_0 : i32, i32
  }
  func.func @transform_2(%arg0: i32) -> (i32, i32) {
    %c0_i32 = arith.constant 0 : i32
    %c0_i32_0 = arith.constant 0 : i32
    %c0_i32_1 = arith.constant 0 : i32
    return %c0_i32, %c0_i32_0 : i32, i32
  }
  func.func @transform_3(%arg0: i32) -> (i32, i32) {
    %c0_i32 = arith.constant 0 : i32
    %c0_i32_0 = arith.constant 0 : i32
    %c0_i32_1 = arith.constant 0 : i32
    return %c0_i32, %c0_i32_0 : i32, i32
  }
  func.func @transform_4(%arg0: i32) -> (i32, i32, i32) {
    %c0_i32 = arith.constant 0 : i32
    %c0_i32_0 = arith.constant 0 : i32
    %c0_i32_1 = arith.constant 0 : i32
    %c0_i32_2 = arith.constant 0 : i32
    return %c0_i32, %c0_i32_0, %c0_i32_1 : i32, i32, i32
  }
}

</mosaic_0001>

<llo_original>
// kernel: patch_embedding.1
$region0: #{patch_embedding.1}
  #allocation0 [shape = 'u32[]', space=smem, size = 0x4, offset = 0x4, fixed_abs, tag = 'smem constant byte address 0x4 - core index']
  #allocation1 [shape = 'u32[72,128]{1,0:T(1,128)}', space=vmem, size = 0x9000, scoped, tag = 'internal scratch']
  %s0 = inlined_call_operand.vmem [shape: f32[32,48], index: 0, kind: input, shape index: {}]
  %s1 = inlined_call_operand.vmem [shape: f32[48,128], index: 1, kind: input, shape index: {}]
  %s2 = inlined_call_operand.vmem [shape: f32[2,128], index: 2, kind: input, shape index: {}]
  %s3 = inlined_call_operand.vmem [shape: f32[16,128], index: 3, kind: input, shape index: {}]
  %s4 = inlined_call_operand.vmem [shape: f32[2,18,128], index: 4, kind: output, shape index: {}]
  %s5 = sld [smem:[#allocation0]]
  $region26: #{patch_embedding.1} parent=0
    _
  %s7 = ssub.s32 1, %s5
  %s8 = scalar_select 0, %s7, %s5
  // Predicated region
  $region2: #{patch_embedding.1} parent=0 // pred_check
    _
  $region3: #{patch_embedding.1} parent=0 // pred_check_branch
    %10 = sbr.rel (0) target = $region5
  $region4: #{patch_embedding.1} parent=0 // pred_region
    _
  $region5: #{patch_embedding.1} parent=0 // pred_fallthru
    _
  // Predicated region
  $region6: #{patch_embedding.1} parent=0 // pred_check
    _
  $region7: #{patch_embedding.1} parent=0 // pred_check_branch
    %12 = sbr.rel (0) target = $region9
  $region8: #{patch_embedding.1} parent=0 // pred_region
    _
  $region9: #{patch_embedding.1} parent=0 // pred_fallthru
    _
  // Predicated region
  $region10: #{patch_embedding.1} parent=0 // pred_check
    _
  $region11: #{patch_embedding.1} parent=0 // pred_check_branch
    %14 = sbr.rel (0) target = $region13
  $region12: #{patch_embedding.1} parent=0 // pred_region
    _
  $region13: #{patch_embedding.1} parent=0 // pred_fallthru
    _
  // Predicated region
  $region14: #{patch_embedding.1} parent=0 // pred_check
    _
  $region15: #{patch_embedding.1} parent=0 // pred_check_branch
    %16 = sbr.rel (0) target = $region17
  $region16: #{patch_embedding.1} parent=0 // pred_region
    _
  $region17: #{patch_embedding.1} parent=0 // pred_fallthru
    _
  %v17 = vld [vmem:[%s0] sm:$0xff]
  %v18 = vld [vmem:[%s0 + $0x8] sm:$0xff]
  %v19 = vld [vmem:[%s0 + $0x10] sm:$0xff]
  %v20 = vld [vmem:[%s0 + $0x18] sm:$0xff]
  %v21 = vld [vmem:[%s1] sm:$0xff]
  %v22 = vld [vmem:[%s1 + $0x8] sm:$0xff]
  %v23 = vld [vmem:[%s1 + $0x10] sm:$0xff]
  %v24 = vld [vmem:[%s1 + $0x18] sm:$0xff]
  %v25 = vld [vmem:[%s1 + $0x20] sm:$0xff]
  %v26 = vld [vmem:[%s1 + $0x28] sm:$0xff]
  %vm27 = vcmask 392192
  %v29 = vsel %vm27, %v17, 0
  %v32 = vsel %vm27, %v18, 0
  %v35 = vsel %vm27, %v19, 0
  %v38 = vsel %vm27, %v20, 0
  %40 = vmatpush.msra.mxu0 0.0
  %41 = vmatpush.msra.mxu0 0.0
  %42 = vmatpush.msra.mxu0 0.0
  %43 = vmatpush.msra.mxu0 0.0
  %44 = vmatpush.msra.mxu0 0.0
  %45 = vmatpush.msra.mxu0 0.0
  %46 = vmatpush.msra.mxu0 0.0
  %47 = vmatpush.msra.mxu0 0.0
  %48 = vmatpush.msra.mxu0 0.0
  %49 = vmatpush.msra.mxu0 0.0
  %50 = vmatpush.msra.mxu0 %v26
  %51 = vmatpush.msra.mxu0 %v25
  %52 = vmatpush.msra.mxu0 %v24
  %53 = vmatpush.msra.mxu0 %v23
  %54 = vmatpush.msra.mxu0 %v22
  %55 = vmatpush.msra.mxu0 %v21
  %56 = vmatmul.f32.gmra.mxu0 %v29
  %v57 = vpop.f32.mrf.mxu0
  %v58 = vadd.f32 0.0, %v57
  %59 = vmatmul.f32.gmra.mxu0 %v32
  %v60 = vpop.f32.mrf.mxu0
  %v61 = vadd.f32 0.0, %v60
  %62 = vmatmul.f32.gmra.mxu0 %v35
  %v63 = vpop.f32.mrf.mxu0
  %v64 = vadd.f32 0.0, %v63
  %65 = vmatmul.f32.gmra.mxu0 %v38
  %v66 = vpop.f32.mrf.mxu0
  %v67 = vadd.f32 0.0, %v66
  %68 = vdwg.mxu0
  %v69 = vld [vmem:[%s3] sm:$0xff]
  %v70 = vld [vmem:[%s3 + $0x8] sm:$0xff]
  %v71 = vadd.f32 %v58, %v69
  %v72 = vadd.f32 %v61, %v70
  %v73 = vadd.f32 %v64, %v69
  %v74 = vadd.f32 %v67, %v70
  %v75 = vld [vmem:[%s2] sm:$0x3]
  %76 = vst [vmem:[%s4] sm:$0x3] %v75
  %77 = vst [vmem:[%s4 + $0x2] sm:$0xff] %v71
  %78 = vst [vmem:[%s4 + $0xa] sm:$0xff] %v72
  %s79 = scalar_lea.vmem %s4, 24
  %80 = vst [vmem:[%s79] sm:$0x3] %v75
  %81 = vst [vmem:[%s79 + $0x2] sm:$0xff] %v73
  %82 = vst [vmem:[%s79 + $0xa] sm:$0xff] %v74
  // Predicated region
  $region18: #{patch_embedding.1} parent=0 // pred_check
    _
  $region19: #{patch_embedding.1} parent=0 // pred_check_branch
    %84 = sbr.rel (0) target = $region21
  $region20: #{patch_embedding.1} parent=0 // pred_region
    _
  $region21: #{patch_embedding.1} parent=0 // pred_fallthru
    _
  // Predicated region
  $region22: #{patch_embedding.1} parent=0 // pred_check
    _
  $region23: #{patch_embedding.1} parent=0 // pred_check_branch
    %86 = sbr.rel (0) target = $region25
  $region24: #{patch_embedding.1} parent=0 // pred_region
    _
  $region25: #{patch_embedding.1} parent=0 // pred_fallthru
    _

</llo_original>
